<compile_context>
chip_gen: v5e
topology: v5e:2x2
jax: 0.10.0
libtpu: 0.0.40
codegen_flags: <defaults>
</compile_context>

<pallas_src>
import jax
import jax.numpy as jnp
from jax.experimental import pallas as pl
from jax.experimental.pallas import tpu as pltpu


def _round_up(n: int, m: int) -> int:
    return ((n + m - 1) // m) * m


def _choose_block(batch: int, block_b: int) -> int:
    """Pick the batch tile TB (always a multiple of 8)."""
    block_b = _round_up(block_b, 8)
    tb = _round_up(pl.cdiv(batch, 4), 128)   # aim for >=4 grid steps (v7x: 2 TCs x >=2)
    tb = max(tb, 1024)                       # amortize ~0.35us/step pipeline overhead
    tb = min(tb, block_b)                    # caller cap (sweep 4096..16384)
    tb = min(tb, _round_up(batch, 8))        # never larger than a single (padded) tile
    return tb


def depression_head_kernel(x_ref, w_ref, b_ref, o_ref):
    # x_ref: (TB, D) VMEM, native dtype (f32 or bf16)
    # w_ref: (1, D)  VMEM, same dtype as x (pre-cast in wrapper), resident across grid
    # b_ref: (1, 1)  SMEM f32 scalar
    # o_ref: (1, 1, TB) VMEM, lane-dense output row in x.dtype
    x = x_ref[...]
    w = w_ref[...]                                   # broadcasts over rows
    prod = x * w                                     # native-dtype VALU multiply
    # XLU lane reduce over D with an f32 accumulator (keeps bf16 path bit-cheap while
    # matching the f32 reference over 96 terms).
    z = jnp.sum(prod, axis=-1, dtype=jnp.float32)    # (TB,) f32
    z = z + b_ref[0, 0]                              # scalar bias from SMEM
    sig = jax.nn.sigmoid(z)                          # EUP, numerically robust
    tb = o_ref.shape[-1]
    o_ref[...] = sig.astype(o_ref.dtype).reshape(1, 1, tb)


def depression_head_forward(x, weight, bias, *, block_b: int = 8192):
    """Forward pass of DepressionHead.

    x:      (B, D) activations (f32 or bf16; kept in native dtype on the DMA path).
    weight: (1, D) nn.Linear weight (PyTorch (out, in) layout; NOT transposed).
    bias:   (1,)   nn.Linear bias.
    Returns (B, 1) sigmoid probabilities in x.dtype.
    """
    B, D = x.shape
    TB = _choose_block(B, block_b)
    G = pl.cdiv(B, TB)                               # ragged final block handled by Pallas

    w = weight.reshape(1, D).astype(x.dtype)         # product in native dtype (bf16-friendly)
    b = bias.reshape(1, 1).astype(jnp.float32)       # SMEM scalar

    out = pl.pallas_call(
        depression_head_kernel,
        out_shape=jax.ShapeDtypeStruct((G, 1, TB), x.dtype),   # lane-dense per-tile rows
        grid=(G,),
        in_specs=[
            pl.BlockSpec((TB, D), lambda i: (i, 0)),            # batch-tiled x (pipelined)
            pl.BlockSpec((1, D), lambda i: (0, 0)),             # weight: fetched once, resident
            pl.BlockSpec(memory_space=pltpu.MemorySpace.SMEM),  # bias: SMEM scalar
        ],
        out_specs=pl.BlockSpec((1, 1, TB), lambda i: (i, 0, 0)),
        compiler_params=pltpu.CompilerParams(
            dimension_semantics=("parallel",),                  # batch axis -> megacore
        ),
    )(x, w, b)

    # Free row-major reshape back to (B, 1); positions >= B (ragged tail) are dropped.
    return out.reshape(G * TB)[:B].reshape(B, 1)


if __name__ == "__main__":
    key = jax.random.PRNGKey(0)
    k_x, k_w, k_b, k_x2, k_x3 = jax.random.split(key, 5)

    D = 96  # input_dim=96 as in the module default
    bound = 1.0 / (D ** 0.5)
    weight = jax.random.uniform(k_w, (1, D), jnp.float32, -bound, bound)  # PyTorch (out, in)
    bias = jax.random.uniform(k_b, (1,), jnp.float32, -bound, bound)

    def ref_fn(xx, ww, bb):
        return jax.nn.sigmoid(xx.astype(jnp.float32) @ ww.astype(jnp.float32).T
                              + bb.astype(jnp.float32))

    # 1) Small single-tile f32 batch.
    B = 8
    x = jax.random.normal(k_x, (B, D), jnp.float32)
    out = jax.block_until_ready(depression_head_forward(x, weight, bias))
    assert out.shape == (B, 1)
    assert jnp.allclose(out, ref_fn(x, weight, bias), atol=1e-5, rtol=1e-5)

    # 2) Multi-tile grid with a ragged final block (B % TB != 0): exercises the
    #    no-pad path where garbage tail rows are computed and then sliced off.
    B2 = 20
    x2 = jax.random.normal(k_x2, (B2, D), jnp.float32)
    out2 = jax.block_until_ready(depression_head_forward(x2, weight, bias, block_b=8))
    assert out2.shape == (B2, 1)
    assert jnp.allclose(out2, ref_fn(x2, weight, bias), atol=1e-5, rtol=1e-5)

    # 3) bf16 activations: native-dtype product, f32 accumulate, bf16 output.
    B3 = 200
    x3 = jax.random.normal(k_x3, (B3, D), jnp.float32).astype(jnp.bfloat16)
    w16 = weight.astype(jnp.bfloat16)
    out3 = jax.block_until_ready(depression_head_forward(x3, weight, bias))
    ref3 = ref_fn(x3, w16, bias)
    assert out3.shape == (B3, 1)
    assert jnp.allclose(out3.astype(jnp.float32), ref3, atol=2e-2)

    print("KERNEL_OK")
</pallas_src>

<mosaic_0001>
module attributes {stable_mosaic.version = 11 : i64} {
  func.func @depression_head_kernel(%arg0: i32, %arg1: memref<8x96xf32, #tpu.memory_space<vmem>>, %arg2: memref<1x96xf32, #tpu.memory_space<vmem>>, %arg3: memref<1x1xf32, #tpu.memory_space<smem>>, %arg4: memref<1x1x8xf32, #tpu.memory_space<vmem>>) attributes {dimension_semantics = [#tpu.dimension_semantics<parallel>], iteration_bounds = array<i64: 1>, scalar_prefetch = 0 : i64, scratch_operands = 0 : i64, tpu.core_type = #tpu.core_type<tc>, window_params = [{transform_indices = @transform_0, window_bounds = array<i64: 8, 96>}, {pipeline_mode = #tpu.pipeline_mode<synchronous>, transform_indices = @transform_1, window_bounds = array<i64: 1, 96>}, {transform_indices = @transform_2, window_bounds = array<i64: 1, 1>}, {transform_indices = @transform_3, window_bounds = array<i64: 1, 1, 8>}]} {
    %c0 = arith.constant 0 : index
    %c0_0 = arith.constant 0 : index
    %0 = vector.load %arg1[%c0, %c0_0] : memref<8x96xf32, #tpu.memory_space<vmem>>, vector<8x96xf32>
    %c0_1 = arith.constant 0 : index
    %c0_2 = arith.constant 0 : index
    %1 = vector.load %arg2[%c0_1, %c0_2] : memref<1x96xf32, #tpu.memory_space<vmem>>, vector<1x96xf32>
    %2 = vector.broadcast %1 : vector<1x96xf32> to vector<8x96xf32>
    %3 = arith.mulf %0, %2 : vector<8x96xf32>
    %cst = arith.constant dense<0.000000e+00> : vector<8xf32>
    %4 = vector.multi_reduction <add>, %3, %cst [1] : vector<8x96xf32> to vector<8xf32>
    %c0_3 = arith.constant 0 : index
    %c0_4 = arith.constant 0 : index
    %5 = memref.load %arg3[%c0_3, %c0_4] : memref<1x1xf32, #tpu.memory_space<smem>>
    %6 = vector.broadcast %5 : f32 to vector<8xf32>
    %7 = arith.addf %4, %6 : vector<8xf32>
    %8 = arith.negf %7 : vector<8xf32>
    %9 = math.exp %8 : vector<8xf32>
    %cst_5 = arith.constant 1.000000e+00 : f32
    %10 = vector.broadcast %cst_5 : f32 to vector<8xf32>
    %11 = arith.addf %10, %9 : vector<8xf32>
    %12 = arith.divf %10, %11 : vector<8xf32>
    %13 = vector.shape_cast %12 : vector<8xf32> to vector<1x1x8xf32>
    %c0_6 = arith.constant 0 : index
    %c0_7 = arith.constant 0 : index
    %c0_8 = arith.constant 0 : index
    %14 = vector.load %arg4[%c0_6, %c0_7, %c0_8] : memref<1x1x8xf32, #tpu.memory_space<vmem>>, vector<1x1x8xf32>
    tpu.vector_store %arg4[%c0_6, %c0_7, %c0_8], %13 {strides = array<i32>} : memref<1x1x8xf32, #tpu.memory_space<vmem>>, vector<1x1x8xf32>,
    return
  }
  func.func @transform_0(%arg0: i32) -> (i32, i32) {
    %c0_i32 = arith.constant 0 : i32
    %c0_i32_0 = arith.constant 0 : i32
    return %arg0, %c0_i32 : i32, i32
  }
  func.func @transform_1(%arg0: i32) -> (i32, i32) {
    %c0_i32 = arith.constant 0 : i32
    %c0_i32_0 = arith.constant 0 : i32
    %c0_i32_1 = arith.constant 0 : i32
    return %c0_i32, %c0_i32_0 : i32, i32
  }
  func.func @transform_2(%arg0: i32) -> (i32, i32) {
    %c0_i32 = arith.constant 0 : i32
    %c0_i32_0 = arith.constant 0 : i32
    %c0_i32_1 = arith.constant 0 : i32
    return %c0_i32, %c0_i32_0 : i32, i32
  }
  func.func @transform_3(%arg0: i32) -> (i32, i32, i32) {
    %c0_i32 = arith.constant 0 : i32
    %c0_i32_0 = arith.constant 0 : i32
    %c0_i32_1 = arith.constant 0 : i32
    return %arg0, %c0_i32, %c0_i32_0 : i32, i32, i32
  }
}

</mosaic_0001>

<llo_original>
// kernel: tpu_custom_call.1
$region0: #{tpu_custom_call.1}
  #allocation0 [shape = 'u32[]', space=smem, size = 0x4, offset = 0x4, fixed_abs, tag = 'smem constant byte address 0x4 - core index']
  #allocation1 [shape = 'u32[72,128]{1,0:T(1,128)}', space=vmem, size = 0x9000, scoped, tag = 'internal scratch']
  #allocation2 [shape = 'f32[1,1]{1,0:T(1,128)S(6)}', space=smem, size = 0x200, scoped, tag = 'scoped memory for tpu_custom_call.1']
  %s0 = inlined_call_operand.hbm [shape: f32[8,96], index: 0, kind: input, shape index: {}]
  %s1 = inlined_call_operand.vmem [shape: f32[1,96], index: 1, kind: input, shape index: {}]
  %s2 = inlined_call_operand.<no memory space> [shape: f32[1,1], index: 2, kind: input, shape index: {}]
  %s3 = inlined_call_operand.hbm [shape: f32[1,1,8], index: 3, kind: output, shape index: {}]
  %s4 = sld [smem:[#allocation0]]
  $region26: #{tpu_custom_call.1} parent=0
    _
  %s6 = ssub.s32 1, %s4
  %s7 = scalar_select 0, %s6, %s4
  %8 = sst [smem:[#allocation2]] %s2
  $region1: #{tpu_custom_call.1} parent=0
    #allocation3 [shape = 'u8[4096]{0}', space=vmem, size = 0x1000, scoped, tag = 'input window, operand 0, single buffered']
    #allocation4 [shape = 's32[1]{0}', space=sflag, size = 0x4, scoped, tag = 'scoped memory for tpu_custom_call.1']
    #allocation5 [shape = 's32[1]{0}', space=sflag, size = 0x4, scoped, tag = 'scoped memory for tpu_custom_call.1']
    #allocation6 [shape = 'u8[512]{0}', space=vmem, size = 0x400, scoped, tag = 'output window, operand 0, single buffered']
    %9 = vsyncpa [#allocation4], 0
    %10 = vsyncpa [#allocation5], 0
    // Predicated region
    $region2: #{tpu_custom_call.1} parent=1 // pred_check
      _
    $region3: #{tpu_custom_call.1} parent=1 // pred_check_branch
      %12 = sbr.rel (0) target = $region5
    $region4: #{tpu_custom_call.1} parent=1 // pred_region
      %14 = vsyncadd [#allocation4], 0
      %s16 = sshll.u32 %s0, 4
      %s17 = int_to_ptr.hbm [resolvable:$true] %s16
      %s18 = sshll.u32 [#allocation3], 4
      %s19 = int_to_ptr.vmem [resolvable:$true] %s18
      %21 = dma.hbm_to_vmem [thread:$0]  %s17, 128, %s19, [#allocation4]
    $region5: #{tpu_custom_call.1} parent=1 // pred_fallthru
      _
    // Predicated region
    $region6: #{tpu_custom_call.1} parent=1 // pred_check
      _
    $region7: #{tpu_custom_call.1} parent=1 // pred_check_branch
      %23 = sbr.rel (0) target = $region9
    $region8: #{tpu_custom_call.1} parent=1 // pred_region
      _
    $region9: #{tpu_custom_call.1} parent=1 // pred_fallthru
      _
    // Predicated region
    $region10: #{tpu_custom_call.1} parent=1 // pred_check
      _
    $region11: #{tpu_custom_call.1} parent=1 // pred_check_branch
      %25 = sbr.rel (0) target = $region13
    $region12: #{tpu_custom_call.1} parent=1 // pred_region
      _
    $region13: #{tpu_custom_call.1} parent=1 // pred_fallthru
      _
    // Predicated region
    $region14: #{tpu_custom_call.1} parent=1 // pred_check
      _
    $region15: #{tpu_custom_call.1} parent=1 // pred_check_branch
      %27 = sbr.rel (0) target = $region17
    $region16: #{tpu_custom_call.1} parent=1 // pred_region
      %29 = dma.done [#allocation4], 128
    $region17: #{tpu_custom_call.1} parent=1 // pred_fallthru
      _
    %v30 = vld [vmem:[#allocation3] sm:$0xff]
    %v31 = vld [vmem:[%s1] sm:$0x1]
    %v33 = vperm.slane %v31, 0
    %v35 = vmul.f32 %v30, %v33
    %vm36 = vcmask 785408
    %v37 = vsel %vm36, %v35, 0.0
    %38 = vadd.xlane.f32.xlu0 %v37
    %v39 = vpop.xlane.xlu0 %38
    %s40 = sld [smem:[#allocation2]]
    %v41 = vstv %s40
    %v42 = vadd.f32 %v39, %v41
    %v43 = vxor.u32 %v42, 2147483648
    %v44 = vmul.f32 %v43, 1.442695
    %v45 = vpow.pop %v44
    %v46 = vadd.f32 %v45, 1.0
    %v47 = vrcp.pop %v46
    %v48 = vmul.f32 %v46, %v47
    %v49 = vsub.f32 1.0, %v48
    %v50 = vmul.f32 %v47, %v49
    %v51 = vadd.f32 %v47, %v50
    %vm52 = vweird.f32 %v46
    %vm53 = vweird.f32 %v47
    %vm54 = vmor %vm52, %vm53
    %v55 = vsel %vm54, %v47, %v51
    %v56 = vand.u32 2147483647, %v46
    %vm57 = vcmp.eq.f32.partialorder %v56, 8.507059e+37
    %v58 = vand.u32 %v46, 2147483648
    %v59 = vor.u32 1.1754944e-38, %v58
    %v60 = vsel %vm57, %v59, %v55
    %v61 = vmul.f32 1.0, %v60
    %v63 = vlaneseq
    %v64 = vand.u32 %v63, 127
    %v65 = vperm.slane %v61, %v64
    %vm67 = vcmask 57344
    %68 = vst.msk [vmem:[#allocation6] sm:$0x1] %vm67, %v65
    // Predicated region
    $region18: #{tpu_custom_call.1} parent=1 // pred_check
      _
    $region19: #{tpu_custom_call.1} parent=1 // pred_check_branch
      %70 = sbr.rel (0) target = $region21
    $region20: #{tpu_custom_call.1} parent=1 // pred_region
      %72 = vsyncadd [#allocation5], 0
      %s74 = sshll.u32 [#allocation6], 4
      %s75 = int_to_ptr.vmem [resolvable:$true] %s74
      %s76 = sshll.u32 %s3, 4
      %s77 = int_to_ptr.hbm [resolvable:$true] %s76
      %79 = dma.vmem_to_hbm [thread:$0]  %s75, 16, %s77, [#allocation5]
    $region21: #{tpu_custom_call.1} parent=1 // pred_fallthru
      _
    // Predicated region
    $region22: #{tpu_custom_call.1} parent=1 // pred_check
      _
    $region23: #{tpu_custom_call.1} parent=1 // pred_check_branch
      %81 = sbr.rel (0) target = $region25
    $region24: #{tpu_custom_call.1} parent=1 // pred_region
      %83 = dma.done [#allocation5], 16
    $region25: #{tpu_custom_call.1} parent=1 // pred_fallthru
      _
    %84 = vsyncpa [#allocation4], 1
    %85 = vsyncpa [#allocation5], 1

</llo_original>
